<compile_context>
chip_gen: v5e
topology: v5e:2x2
jax: 0.10.0
libtpu: 0.0.40
codegen_flags: <defaults>
</compile_context>

<pallas_src>
import functools

import jax
import jax.numpy as jnp
from jax.experimental import pallas as pl
from jax.experimental.pallas import tpu as pltpu

LANE = 128                     # padded lane width of every layer
SUB = 8                        # f32 sublane tile
WROWS = LANE                   # rows of each packed weight block (K padded to 128)
BROWS = SUB                    # rows of each packed bias block (bias lives in row 0)
BLOCK_ROWS = WROWS + BROWS     # 136 rows per layer in the packed params buffer


def _fused_mlp_kernel(x_ref, p_ref, o_ref, *, n_layers):
    """Fully fused MLP: statically unrolled dot+bias+ReLU chain, heaviside epilogue."""
    h = x_ref[...]                                        # (TM, 128) f32
    for i in range(n_layers):
        r0 = i * BLOCK_ROWS
        w = p_ref[r0:r0 + WROWS, :]                       # (128, 128) static, tile-aligned
        bblk = p_ref[r0 + WROWS:r0 + BLOCK_ROWS, :]       # (8, 128)   static, tile-aligned
        h = jnp.dot(h, w, preferred_element_type=jnp.float32)
        h = h + bblk[0:1, :]                              # bias is row 0 of the block
        if i < n_layers - 1:
            h = jnp.maximum(h, 0.0)                       # ReLU between layers
    # torch.heaviside(h, 0.0): 1 where h > 0 else 0 (0 at h == 0).
    # astype-of-compare avoids materializing the 1.0/0.0 select constants.
    o_ref[...] = (h > 0.0).astype(o_ref.dtype)


def pack_params(params):
    """Pack [(W(in,out), b(out,)), ...] into one (L*136, 128) tile-aligned f32 buffer."""
    blocks = []
    for w, b in params:
        fan_in, fan_out = w.shape
        assert fan_in <= LANE and fan_out <= LANE, "layer widths must be <= 128 for this packing"
        wp = jnp.zeros((WROWS, LANE), jnp.float32).at[:fan_in, :fan_out].set(
            w.astype(jnp.float32))
        bp = jnp.zeros((BROWS, LANE), jnp.float32).at[0, :fan_out].set(
            b.reshape(-1).astype(jnp.float32))
        blocks.append(wp)
        blocks.append(bp)
    return jnp.concatenate(blocks, axis=0)


def neural_network_forward(packed_params, x, out_features, *, tile_m=512):
    """Forward pass of the whole MLP as a single fused Pallas launch.

    `packed_params` comes from `pack_params`; `x` is (M, in_features).
    Returns (M, out_features) of {0., 1.} values (heaviside output).
    """
    n_layers = packed_params.shape[0] // BLOCK_ROWS
    M, K = x.shape
    m_pad = max(SUB, ((M + SUB - 1) // SUB) * SUB)

    # Lane-dense input slab; zero-padded columns meet zero weight rows, so the
    # math is unchanged.
    x_p = jnp.zeros((m_pad, LANE), jnp.float32).at[:M, :K].set(x.astype(jnp.float32))

    kernel = functools.partial(_fused_mlp_kernel, n_layers=n_layers)
    vmem = pltpu.MemorySpace.VMEM

    if m_pad <= tile_m:
        # Small-batch path: no grid, two whole-array VMEM operands, one launch.
        out = pl.pallas_call(
            kernel,
            out_shape=jax.ShapeDtypeStruct((m_pad, LANE), jnp.float32),
            in_specs=[pl.BlockSpec(memory_space=vmem),
                      pl.BlockSpec(memory_space=vmem)],
            out_specs=pl.BlockSpec(memory_space=vmem),
        )(x_p, packed_params)
    else:
        # Large-batch path: tile rows; parallel axis shards across v7x's 2 TCs.
        n_tiles = pl.cdiv(m_pad, tile_m)
        m_grid = n_tiles * tile_m
        if m_grid != m_pad:
            x_p = jnp.pad(x_p, ((0, m_grid - m_pad), (0, 0)))
        out = pl.pallas_call(
            kernel,
            out_shape=jax.ShapeDtypeStruct((m_grid, LANE), jnp.float32),
            grid=(n_tiles,),
            in_specs=[pl.BlockSpec((tile_m, LANE), lambda i: (i, 0)),
                      pl.BlockSpec(packed_params.shape, lambda i: (0, 0))],
            out_specs=pl.BlockSpec((tile_m, LANE), lambda i: (i, 0)),
            compiler_params=pltpu.CompilerParams(
                dimension_semantics=("parallel",)),
        )(x_p, packed_params)

    return out[:M, :out_features]


def init_params(neuron_counts, key):
    """Deterministic init mimicking nn.Linear defaults (U(-1/sqrt(fan_in), +)).

    Weights are stored pre-transposed (in, out) so the kernel computes x @ W + b
    (equivalent to PyTorch's x @ W.T with W stored (out, in)).
    """
    params = []
    for i in range(len(neuron_counts) - 1):
        fan_in, fan_out = neuron_counts[i], neuron_counts[i + 1]
        key, kw, kb = jax.random.split(key, 3)
        bound = 1.0 / (fan_in ** 0.5)
        w = jax.random.uniform(kw, (fan_in, fan_out), jnp.float32, -bound, bound)
        b = jax.random.uniform(kb, (fan_out,), jnp.float32, -bound, bound)
        params.append((w, b))
    return params
    # TODO(synk): mutate() (random in-place parameter perturbation) is not part
    # of the forward pass and is left to plain JAX updates of `params`.


if __name__ == "__main__":
    key = jax.random.PRNGKey(0)
    neuron_counts = [16, 32, 32, 4]
    batch = 8

    kx, kp = jax.random.split(key)
    x = jax.random.normal(kx, (batch, neuron_counts[0]), dtype=jnp.float32)
    params = init_params(neuron_counts, kp)
    packed = pack_params(params)

    out = neural_network_forward(packed, x, neuron_counts[-1])
    out = jax.block_until_ready(out)

    # sanity: output is binary {0, 1} with the right shape
    assert out.shape == (batch, neuron_counts[-1])
    assert bool(jnp.all((out == 0.0) | (out == 1.0)))

    # cross-check against a pure-JAX reference of the same math
    ref = x
    for i, (w, b) in enumerate(params):
        ref = jnp.dot(ref, w, preferred_element_type=jnp.float32) + b[None, :]
        if i < len(params) - 1:
            ref = jnp.maximum(ref, 0.0)
    ref = jnp.where(ref > 0.0, 1.0, 0.0)
    assert bool(jnp.all(out == ref))

    print("KERNEL_OK")
</pallas_src>

<mosaic_0001>
module attributes {stable_mosaic.version = 11 : i64} {
  func.func @_fused_mlp_kernel(%arg0: memref<8x128xf32, #tpu.memory_space<vmem>>, %arg1: memref<408x128xf32, #tpu.memory_space<vmem>>, %arg2: memref<8x128xf32, #tpu.memory_space<vmem>>) attributes {dimension_semantics = [], scalar_prefetch = 0 : i64, scratch_operands = 0 : i64, tpu.core_type = #tpu.core_type<tc>} {
    %c0 = arith.constant 0 : index
    %c0_0 = arith.constant 0 : index
    %0 = vector.load %arg0[%c0, %c0_0] : memref<8x128xf32, #tpu.memory_space<vmem>>, vector<8x128xf32>
    %c0_1 = arith.constant 0 : index
    %c0_2 = arith.constant 0 : index
    %1 = vector.load %arg1[%c0_1, %c0_2] : memref<408x128xf32, #tpu.memory_space<vmem>>, vector<128x128xf32>
    %c128 = arith.constant 128 : index
    %c0_3 = arith.constant 0 : index
    %2 = vector.load %arg1[%c128, %c0_3] : memref<408x128xf32, #tpu.memory_space<vmem>>, vector<8x128xf32>
    %cst = arith.constant dense<0.000000e+00> : vector<8x128xf32>
    %3 = tpu.matmul %0, %1, %cst {dimension_numbers = #tpu.dot_dimension_numbers<[1], [0], [0], [1], [0, 0, 1, 1], [], []>} : vector<8x128xf32>, vector<128x128xf32>, vector<8x128xf32> -> vector<8x128xf32>
    %4 = vector.extract_strided_slice %2 {offsets = [0, 0], sizes = [1, 128], strides = [1, 1]} : vector<8x128xf32> to vector<1x128xf32>
    %5 = vector.broadcast %4 : vector<1x128xf32> to vector<8x128xf32>
    %6 = arith.addf %3, %5 : vector<8x128xf32>
    %cst_4 = arith.constant 0.000000e+00 : f32
    %7 = vector.broadcast %cst_4 : f32 to vector<8x128xf32>
    %8 = arith.maximumf %6, %7 : vector<8x128xf32>
    %c136 = arith.constant 136 : index
    %c0_5 = arith.constant 0 : index
    %9 = vector.load %arg1[%c136, %c0_5] : memref<408x128xf32, #tpu.memory_space<vmem>>, vector<128x128xf32>
    %c264 = arith.constant 264 : index
    %c0_6 = arith.constant 0 : index
    %10 = vector.load %arg1[%c264, %c0_6] : memref<408x128xf32, #tpu.memory_space<vmem>>, vector<8x128xf32>
    %cst_7 = arith.constant dense<0.000000e+00> : vector<8x128xf32>
    %11 = tpu.matmul %8, %9, %cst_7 {dimension_numbers = #tpu.dot_dimension_numbers<[1], [0], [0], [1], [0, 0, 1, 1], [], []>} : vector<8x128xf32>, vector<128x128xf32>, vector<8x128xf32> -> vector<8x128xf32>
    %12 = vector.extract_strided_slice %10 {offsets = [0, 0], sizes = [1, 128], strides = [1, 1]} : vector<8x128xf32> to vector<1x128xf32>
    %13 = vector.broadcast %12 : vector<1x128xf32> to vector<8x128xf32>
    %14 = arith.addf %11, %13 : vector<8x128xf32>
    %cst_8 = arith.constant 0.000000e+00 : f32
    %15 = vector.broadcast %cst_8 : f32 to vector<8x128xf32>
    %16 = arith.maximumf %14, %15 : vector<8x128xf32>
    %c272 = arith.constant 272 : index
    %c0_9 = arith.constant 0 : index
    %17 = vector.load %arg1[%c272, %c0_9] : memref<408x128xf32, #tpu.memory_space<vmem>>, vector<128x128xf32>
    %c400 = arith.constant 400 : index
    %c0_10 = arith.constant 0 : index
    %18 = vector.load %arg1[%c400, %c0_10] : memref<408x128xf32, #tpu.memory_space<vmem>>, vector<8x128xf32>
    %cst_11 = arith.constant dense<0.000000e+00> : vector<8x128xf32>
    %19 = tpu.matmul %16, %17, %cst_11 {dimension_numbers = #tpu.dot_dimension_numbers<[1], [0], [0], [1], [0, 0, 1, 1], [], []>} : vector<8x128xf32>, vector<128x128xf32>, vector<8x128xf32> -> vector<8x128xf32>
    %20 = vector.extract_strided_slice %18 {offsets = [0, 0], sizes = [1, 128], strides = [1, 1]} : vector<8x128xf32> to vector<1x128xf32>
    %21 = vector.broadcast %20 : vector<1x128xf32> to vector<8x128xf32>
    %22 = arith.addf %19, %21 : vector<8x128xf32>
    %cst_12 = arith.constant 0.000000e+00 : f32
    %23 = vector.broadcast %cst_12 : f32 to vector<8x128xf32>
    %24 = arith.cmpf ogt, %22, %23 : vector<8x128xf32>
    %25 = arith.extui %24 : vector<8x128xi1> to vector<8x128xi32>
    %26 = arith.sitofp %25 : vector<8x128xi32> to vector<8x128xf32>
    %c0_13 = arith.constant 0 : index
    %c0_14 = arith.constant 0 : index
    %27 = vector.load %arg2[%c0_13, %c0_14] : memref<8x128xf32, #tpu.memory_space<vmem>>, vector<8x128xf32>
    tpu.vector_store %arg2[%c0_13, %c0_14], %26 {strides = array<i32>} : memref<8x128xf32, #tpu.memory_space<vmem>>, vector<8x128xf32>,
    return
  }
}

</mosaic_0001>

<llo_original>
// kernel: tpu_custom_call.1
$region0: #{tpu_custom_call.1}
  #allocation0 [shape = 'u32[]', space=smem, size = 0x4, offset = 0x4, fixed_abs, tag = 'smem constant byte address 0x4 - core index']
  #allocation1 [shape = 'u32[72,128]{1,0:T(1,128)}', space=vmem, size = 0x9000, scoped, tag = 'internal scratch']
  %s0 = inlined_call_operand.hbm [shape: f32[8,128], index: 0, kind: input, shape index: {}]
  %s1 = inlined_call_operand.hbm [shape: f32[408,128], index: 1, kind: input, shape index: {}]
  %s2 = inlined_call_operand.hbm [shape: f32[8,128], index: 2, kind: output, shape index: {}]
  %s3 = sld [smem:[#allocation0]]
  $region26: #{tpu_custom_call.1} parent=0
    _
  %s5 = ssub.s32 1, %s3
  %s6 = scalar_select 0, %s5, %s3
  $region1: #{tpu_custom_call.1} parent=0
    #allocation2 [shape = 'u8[4096]{0}', space=vmem, size = 0x1000, scoped, tag = 'input window, operand 0, single buffered']
    #allocation3 [shape = 's32[1]{0}', space=sflag, size = 0x4, scoped, tag = 'scoped memory for tpu_custom_call.1']
    #allocation4 [shape = 's32[1]{0}', space=sflag, size = 0x4, scoped, tag = 'scoped memory for tpu_custom_call.1']
    #allocation5 [shape = 'u8[208896]{0}', space=vmem, size = 0x33000, scoped, tag = 'input window, operand 1, single buffered']
    #allocation6 [shape = 's32[1]{0}', space=sflag, size = 0x4, scoped, tag = 'scoped memory for tpu_custom_call.1']
    #allocation7 [shape = 'u8[4096]{0}', space=vmem, size = 0x1000, scoped, tag = 'output window, operand 0, single buffered']
    %7 = vsyncpa [#allocation3], 0
    %8 = vsyncpa [#allocation6], 0
    %9 = vsyncpa [#allocation4], 0
    // Predicated region
    $region2: #{tpu_custom_call.1} parent=1 // pred_check
      _
    $region3: #{tpu_custom_call.1} parent=1 // pred_check_branch
      %11 = sbr.rel (0) target = $region5
    $region4: #{tpu_custom_call.1} parent=1 // pred_region
      %13 = vsyncadd [#allocation3], 0
      %s15 = sshll.u32 %s0, 4
      %s16 = int_to_ptr.hbm [resolvable:$true] %s15
      %s17 = sshll.u32 [#allocation2], 4
      %s18 = int_to_ptr.vmem [resolvable:$true] %s17
      %20 = dma.hbm_to_vmem [thread:$0]  %s16, 128, %s18, [#allocation3]
    $region5: #{tpu_custom_call.1} parent=1 // pred_fallthru
      _
    // Predicated region
    $region6: #{tpu_custom_call.1} parent=1 // pred_check
      _
    $region7: #{tpu_custom_call.1} parent=1 // pred_check_branch
      %22 = sbr.rel (0) target = $region9
    $region8: #{tpu_custom_call.1} parent=1 // pred_region
      %24 = vsyncadd [#allocation6], 0
      %s25 = sshll.u32 %s1, 4
      %s26 = int_to_ptr.hbm [resolvable:$true] %s25
      %s27 = sshll.u32 [#allocation5], 4
      %s28 = int_to_ptr.vmem [resolvable:$true] %s27
      %33 = dma.hbm_to_vmem [thread:$0]  %s26, 6528, %s28, [#allocation6], 128, 128, 8
    $region9: #{tpu_custom_call.1} parent=1 // pred_fallthru
      _
    // Predicated region
    $region10: #{tpu_custom_call.1} parent=1 // pred_check
      _
    $region11: #{tpu_custom_call.1} parent=1 // pred_check_branch
      %35 = sbr.rel (0) target = $region13
    $region12: #{tpu_custom_call.1} parent=1 // pred_region
      %37 = dma.done [#allocation3], 128
    $region13: #{tpu_custom_call.1} parent=1 // pred_fallthru
      _
    // Predicated region
    $region14: #{tpu_custom_call.1} parent=1 // pred_check
      _
    $region15: #{tpu_custom_call.1} parent=1 // pred_check_branch
      %39 = sbr.rel (0) target = $region17
    $region16: #{tpu_custom_call.1} parent=1 // pred_region
      %41 = dma.done [#allocation6], 6528
    $region17: #{tpu_custom_call.1} parent=1 // pred_fallthru
      _
    %v42 = vld [vmem:[#allocation2] sm:$0xff]
    %v43 = vld [vmem:[#allocation5] sm:$0xff]
    %v44 = vld [vmem:[#allocation5 + $0x8] sm:$0xff]
    %v45 = vld [vmem:[#allocation5 + $0x10] sm:$0xff]
    %v46 = vld [vmem:[#allocation5 + $0x18] sm:$0xff]
    %v47 = vld [vmem:[#allocation5 + $0x20] sm:$0xff]
    %v48 = vld [vmem:[#allocation5 + $0x28] sm:$0xff]
    %v49 = vld [vmem:[#allocation5 + $0x30] sm:$0xff]
    %v50 = vld [vmem:[#allocation5 + $0x38] sm:$0xff]
    %v51 = vld [vmem:[#allocation5 + $0x40] sm:$0xff]
    %v52 = vld [vmem:[#allocation5 + $0x48] sm:$0xff]
    %v53 = vld [vmem:[#allocation5 + $0x50] sm:$0xff]
    %v54 = vld [vmem:[#allocation5 + $0x58] sm:$0xff]
    %v55 = vld [vmem:[#allocation5 + $0x60] sm:$0xff]
    %v56 = vld [vmem:[#allocation5 + $0x68] sm:$0xff]
    %v57 = vld [vmem:[#allocation5 + $0x70] sm:$0xff]
    %v58 = vld [vmem:[#allocation5 + $0x78] sm:$0xff]
    %v59 = vld [vmem:[#allocation5 + $0x80] sm:$0xff]
    %v60 = vperm.slane %v59, 0
    %61 = vmatpush.msra.mxu0 %v58
    %62 = vmatpush.msra.mxu0 %v57
    %63 = vmatpush.msra.mxu0 %v56
    %64 = vmatpush.msra.mxu0 %v55
    %65 = vmatpush.msra.mxu0 %v54
    %66 = vmatpush.msra.mxu0 %v53
    %67 = vmatpush.msra.mxu0 %v52
    %68 = vmatpush.msra.mxu0 %v51
    %69 = vmatpush.msra.mxu0 %v50
    %70 = vmatpush.msra.mxu0 %v49
    %71 = vmatpush.msra.mxu0 %v48
    %72 = vmatpush.msra.mxu0 %v47
    %73 = vmatpush.msra.mxu0 %v46
    %74 = vmatpush.msra.mxu0 %v45
    %75 = vmatpush.msra.mxu0 %v44
    %76 = vmatpush.msra.mxu0 %v43
    %77 = vmatmul.f32.gmra.mxu0 %v42
    %v78 = vpop.f32.mrf.mxu0
    %v79 = vadd.f32 %v60, %v78
    %80 = vdwg.mxu0
    %v81 = vmax.f32 %v79, 0.0
    %v82 = vld [vmem:[#allocation5 + $0x88] sm:$0xff]
    %v83 = vld [vmem:[#allocation5 + $0x90] sm:$0xff]
    %v84 = vld [vmem:[#allocation5 + $0x98] sm:$0xff]
    %v85 = vld [vmem:[#allocation5 + $0xa0] sm:$0xff]
    %v86 = vld [vmem:[#allocation5 + $0xa8] sm:$0xff]
    %v87 = vld [vmem:[#allocation5 + $0xb0] sm:$0xff]
    %v88 = vld [vmem:[#allocation5 + $0xb8] sm:$0xff]
    %v89 = vld [vmem:[#allocation5 + $0xc0] sm:$0xff]
    %v90 = vld [vmem:[#allocation5 + $0xc8] sm:$0xff]
    %v91 = vld [vmem:[#allocation5 + $0xd0] sm:$0xff]
    %v92 = vld [vmem:[#allocation5 + $0xd8] sm:$0xff]
    %v93 = vld [vmem:[#allocation5 + $0xe0] sm:$0xff]
    %v94 = vld [vmem:[#allocation5 + $0xe8] sm:$0xff]
    %v95 = vld [vmem:[#allocation5 + $0xf0] sm:$0xff]
    %v96 = vld [vmem:[#allocation5 + $0xf8] sm:$0xff]
    %v97 = vld [vmem:[#allocation5 + $0x100] sm:$0xff]
    %v98 = vld [vmem:[#allocation5 + $0x108] sm:$0xff]
    %v99 = vperm.slane %v98, 0
    %100 = vmatpush.msra.mxu0 %v97
    %101 = vmatpush.msra.mxu0 %v96
    %102 = vmatpush.msra.mxu0 %v95
    %103 = vmatpush.msra.mxu0 %v94
    %104 = vmatpush.msra.mxu0 %v93
    %105 = vmatpush.msra.mxu0 %v92
    %106 = vmatpush.msra.mxu0 %v91
    %107 = vmatpush.msra.mxu0 %v90
    %108 = vmatpush.msra.mxu0 %v89
    %109 = vmatpush.msra.mxu0 %v88
    %110 = vmatpush.msra.mxu0 %v87
    %111 = vmatpush.msra.mxu0 %v86
    %112 = vmatpush.msra.mxu0 %v85
    %113 = vmatpush.msra.mxu0 %v84
    %114 = vmatpush.msra.mxu0 %v83
    %115 = vmatpush.msra.mxu0 %v82
    %116 = vmatmul.f32.gmra.mxu0 %v81
    %v117 = vpop.f32.mrf.mxu0
    %v118 = vadd.f32 %v99, %v117
    %119 = vdwg.mxu0
    %v120 = vmax.f32 %v118, 0.0
    %v121 = vld [vmem:[#allocation5 + $0x110] sm:$0xff]
    %v122 = vld [vmem:[#allocation5 + $0x118] sm:$0xff]
    %v123 = vld [vmem:[#allocation5 + $0x120] sm:$0xff]
    %v124 = vld [vmem:[#allocation5 + $0x128] sm:$0xff]
    %v125 = vld [vmem:[#allocation5 + $0x130] sm:$0xff]
    %v126 = vld [vmem:[#allocation5 + $0x138] sm:$0xff]
    %v127 = vld [vmem:[#allocation5 + $0x140] sm:$0xff]
    %v128 = vld [vmem:[#allocation5 + $0x148] sm:$0xff]
    %v129 = vld [vmem:[#allocation5 + $0x150] sm:$0xff]
    %v130 = vld [vmem:[#allocation5 + $0x158] sm:$0xff]
    %v131 = vld [vmem:[#allocation5 + $0x160] sm:$0xff]
    %v132 = vld [vmem:[#allocation5 + $0x168] sm:$0xff]
    %v133 = vld [vmem:[#allocation5 + $0x170] sm:$0xff]
    %v134 = vld [vmem:[#allocation5 + $0x178] sm:$0xff]
    %v135 = vld [vmem:[#allocation5 + $0x180] sm:$0xff]
    %v136 = vld [vmem:[#allocation5 + $0x188] sm:$0xff]
    %v137 = vld [vmem:[#allocation5 + $0x190] sm:$0xff]
    %v138 = vperm.slane %v137, 0
    %139 = vmatpush.msra.mxu0 %v136
    %140 = vmatpush.msra.mxu0 %v135
    %141 = vmatpush.msra.mxu0 %v134
    %142 = vmatpush.msra.mxu0 %v133
    %143 = vmatpush.msra.mxu0 %v132
    %144 = vmatpush.msra.mxu0 %v131
    %145 = vmatpush.msra.mxu0 %v130
    %146 = vmatpush.msra.mxu0 %v129
    %147 = vmatpush.msra.mxu0 %v128
    %148 = vmatpush.msra.mxu0 %v127
    %149 = vmatpush.msra.mxu0 %v126
    %150 = vmatpush.msra.mxu0 %v125
    %151 = vmatpush.msra.mxu0 %v124
    %152 = vmatpush.msra.mxu0 %v123
    %153 = vmatpush.msra.mxu0 %v122
    %154 = vmatpush.msra.mxu0 %v121
    %155 = vmatmul.f32.gmra.mxu0 %v120
    %v156 = vpop.f32.mrf.mxu0
    %v157 = vadd.f32 %v138, %v156
    %158 = vdwg.mxu0
    %vm159 = vcmp.gt.f32.partialorder %v157, 0.0
    %v160 = vsel %vm159, 1, 0
    %v161 = vcvt.s32.f32 %v160
    %162 = vst [vmem:[#allocation7] sm:$0xff] %v161
    // Predicated region
    $region18: #{tpu_custom_call.1} parent=1 // pred_check
      _
    $region19: #{tpu_custom_call.1} parent=1 // pred_check_branch
      %164 = sbr.rel (0) target = $region21
    $region20: #{tpu_custom_call.1} parent=1 // pred_region
      %166 = vsyncadd [#allocation4], 0
      %s168 = sshll.u32 [#allocation7], 4
      %s169 = int_to_ptr.vmem [resolvable:$true] %s168
      %s170 = sshll.u32 %s2, 4
      %s171 = int_to_ptr.hbm [resolvable:$true] %s170
      %173 = dma.vmem_to_hbm [thread:$0]  %s169, 128, %s171, [#allocation4]
    $region21: #{tpu_custom_call.1} parent=1 // pred_fallthru
      _
    // Predicated region
    $region22: #{tpu_custom_call.1} parent=1 // pred_check
      _
    $region23: #{tpu_custom_call.1} parent=1 // pred_check_branch
      %175 = sbr.rel (0) target = $region25
    $region24: #{tpu_custom_call.1} parent=1 // pred_region
      %177 = dma.done [#allocation4], 128
    $region25: #{tpu_custom_call.1} parent=1 // pred_fallthru
      _
    %178 = vsyncpa [#allocation3], 1
    %179 = vsyncpa [#allocation6], 1
    %180 = vsyncpa [#allocation4], 1

</llo_original>
